<compile_context>
chip_gen: v5e
topology: v5e:2x2
jax: 0.10.0
libtpu: 0.0.40
codegen_flags: <defaults>
</compile_context>

<pallas_src>
import functools

import jax
import jax.numpy as jnp
from jax.experimental import pallas as pl
from jax.experimental.pallas import tpu as pltpu


def _encoder_kernel(xT_ref, aT_ref, wfT_ref, b0_ref, w1T_ref, b1_ref,
                    w2T_ref, b2_ref, hT_ref):
    """One grid step = TB graphs (TB*N node columns), fully fused.

    All operands are transposed ([features, nodes]) so every MXU dot and the
    output store are lane-dense; aT is the block-diagonal transposed adjacency
    of the TB graphs in this tile.
    """

    def mxu(a, b):
        # bf16 MXU operands, f32 accumulation.
        return jnp.dot(a.astype(jnp.bfloat16), b.astype(jnp.bfloat16),
                       preferred_element_type=jnp.float32)

    aT = aT_ref[...]                                   # [TB*N, TB*N] (bf16)

    # --- GCN layer 0 (residual=False), W_emb folded into W0 ---
    xaT = mxu(xT_ref[...], aT)                         # (A @ X)^T : [INP_P, TB*N]
    h = jnp.maximum(mxu(wfT_ref[...], xaT) + b0_ref[...], 0.0)   # [EMB, TB*N] f32

    # --- GCN layer 1 (residual=True) ---
    m = mxu(h, aT)                                     # (A @ H)^T
    h = jnp.maximum(mxu(w1T_ref[...], m) + b1_ref[...], 0.0) + h

    # --- GCN layer 2 (residual=True) ---
    m = mxu(h, aT)
    h = jnp.maximum(mxu(w2T_ref[...], m) + b2_ref[...], 0.0) + h

    hT_ref[...] = h.astype(hT_ref.dtype)


@functools.partial(jax.jit, static_argnames=("tb",))
def encoder_forward(adj, x, w_emb, w0, b0, w1, b1, w2, b2, *, tb=16):
    """adj: [B,N,N], x: [B,N,INP], weights in math ([in,out]) layout, biases [EMB]."""
    B, N, INP = x.shape
    EMB = w_emb.shape[1]
    assert B % tb == 0, "batch must be a multiple of the graph tile"
    G = B // tb
    TBN = tb * N
    assert (TBN % 128 == 0) or (G == 1), "tile node-columns must be lane-aligned"

    bf16 = jnp.bfloat16
    # Pad the tiny input-feature contraction dim up to a multiple of 8 (zero rows/cols).
    INP_P = max(8, -(-INP // 8) * 8)

    # X^T : [INP_P, B*N]  (node axis on lanes)
    xT = jnp.transpose(x.reshape(B * N, INP))
    xT = jnp.pad(xT, ((0, INP_P - INP), (0, 0))).astype(bf16)

    # Per-tile block-diagonal transposed adjacency : [G, TB*N, TB*N]
    adjT = jnp.swapaxes(adj, -1, -2).reshape(G, tb, N, N)
    eye = jnp.eye(tb, dtype=adj.dtype)
    a_bdT = jnp.einsum("ij,gikl->gikjl", eye, adjT).reshape(G, TBN, TBN).astype(bf16)

    # Fold W_emb into layer 0; pass weights transposed ([out,in]).
    wfT = jnp.pad((w_emb @ w0).T, ((0, 0), (0, INP_P - INP))).astype(bf16)  # [EMB, INP_P]
    w1T = w1.T.astype(bf16)
    w2T = w2.T.astype(bf16)
    # Biases pre-broadcast to lane width -> plain elementwise add in-kernel.
    b0b = jnp.broadcast_to(b0.astype(jnp.float32).reshape(EMB, 1), (EMB, TBN))
    b1b = jnp.broadcast_to(b1.astype(jnp.float32).reshape(EMB, 1), (EMB, TBN))
    b2b = jnp.broadcast_to(b2.astype(jnp.float32).reshape(EMB, 1), (EMB, TBN))

    full = lambda arr: pl.BlockSpec(arr.shape, lambda g: (0,) * arr.ndim)

    flops_step = 2 * (INP_P * TBN * TBN + EMB * INP_P * TBN
                      + 2 * (EMB * TBN * TBN + EMB * EMB * TBN))
    bytes_acc = (xT.size * 2 + a_bdT.size * 2
                 + (wfT.size + w1T.size + w2T.size) * 2
                 + (b0b.size + b1b.size + b2b.size) * 4
                 + EMB * B * N * 4)

    hT = pl.pallas_call(
        _encoder_kernel,
        out_shape=jax.ShapeDtypeStruct((EMB, B * N), jnp.float32),
        grid=(G,),
        in_specs=[
            pl.BlockSpec((INP_P, TBN), lambda g: (0, g)),         # X^T tile
            pl.BlockSpec((None, TBN, TBN), lambda g: (g, 0, 0)),  # block-diag A^T tile
            full(wfT), full(b0b), full(w1T), full(b1b), full(w2T), full(b2b),
        ],
        out_specs=pl.BlockSpec((EMB, TBN), lambda g: (0, g)),
        compiler_params=pltpu.CompilerParams(
            dimension_semantics=("parallel",)),
        cost_estimate=pl.CostEstimate(flops=G * flops_step, transcendentals=0,
                                      bytes_accessed=bytes_acc),
    )(xT, a_bdT, wfT, b0b, w1T, b1b, w2T, b2b)

    # Back to natural layout; SumPooling readout from H (wrapper-side).
    h = jnp.transpose(hT).reshape(B, N, EMB)
    readout = jnp.sum(h, axis=1)
    return h, readout


def _reference_forward(adj, x, w_emb, w0, b0, w1, b1, w2, b2):
    """Plain-JAX f32 reference of the same forward pass (for sanity check)."""
    h = x @ w_emb                                     # [B, N, EMB]
    m = jnp.einsum("bij,bjk->bik", adj, h)
    h = jnp.maximum(m @ w0 + b0, 0.0)                 # residual=False
    m = jnp.einsum("bij,bjk->bik", adj, h)
    h = jnp.maximum(m @ w1 + b1, 0.0) + h             # residual=True
    m = jnp.einsum("bij,bjk->bik", adj, h)
    h = jnp.maximum(m @ w2 + b2, 0.0) + h             # residual=True
    return h, jnp.sum(h, axis=1)


if __name__ == "__main__":
    # 32 graphs x 8 nodes -> 2 grid steps of 16 graphs (128 node columns) each.
    B, N, INP, EMB = 32, 8, 4, 32

    key = jax.random.PRNGKey(0)
    k_x, k_a, k_we, k_w0, k_b0, k_w1, k_b1, k_w2, k_b2 = jax.random.split(key, 9)

    # Node features.
    x = jax.random.normal(k_x, (B, N, INP), dtype=jnp.float32)

    # Random symmetric adjacency per graph, no self loops ('sum' aggregation).
    up = (jax.random.uniform(k_a, (B, N, N)) < 0.4).astype(jnp.float32)
    upper = jnp.triu(up, k=1)
    adj = upper + jnp.swapaxes(upper, -1, -2)

    # Deterministic parameter init (Linear weights stored as [in, out]).
    scale = 0.1
    w_emb = scale * jax.random.normal(k_we, (INP, EMB), jnp.float32)
    w0 = scale * jax.random.normal(k_w0, (EMB, EMB), jnp.float32)
    b0 = scale * jax.random.normal(k_b0, (EMB,), jnp.float32)
    w1 = scale * jax.random.normal(k_w1, (EMB, EMB), jnp.float32)
    b1 = scale * jax.random.normal(k_b1, (EMB,), jnp.float32)
    w2 = scale * jax.random.normal(k_w2, (EMB, EMB), jnp.float32)
    b2 = scale * jax.random.normal(k_b2, (EMB,), jnp.float32)

    h, readout = encoder_forward(adj, x, w_emb, w0, b0, w1, b1, w2, b2, tb=16)
    jax.block_until_ready((h, readout))

    h_ref, r_ref = _reference_forward(adj, x, w_emb, w0, b0, w1, b1, w2, b2)

    # bf16 MXU operands vs f32 reference -> compare with a normalized max-error bound.
    def rel_err(a, b):
        return float(jnp.max(jnp.abs(a - b)) / (jnp.max(jnp.abs(b)) + 1e-6))

    assert rel_err(h, h_ref) < 3e-2, rel_err(h, h_ref)
    assert rel_err(readout, r_ref) < 3e-2, rel_err(readout, r_ref)

    print("KERNEL_OK")
</pallas_src>

<mosaic_0001>
module attributes {stable_mosaic.version = 11 : i64} {
  func.func @_encoder_kernel(%arg0: i32, %arg1: memref<8x128xbf16, #tpu.memory_space<vmem>>, %arg2: memref<1x128x128xbf16, #tpu.memory_space<vmem>>, %arg3: memref<32x8xbf16, #tpu.memory_space<vmem>>, %arg4: memref<32x128xf32, #tpu.memory_space<vmem>>, %arg5: memref<32x32xbf16, #tpu.memory_space<vmem>>, %arg6: memref<32x128xf32, #tpu.memory_space<vmem>>, %arg7: memref<32x32xbf16, #tpu.memory_space<vmem>>, %arg8: memref<32x128xf32, #tpu.memory_space<vmem>>, %arg9: memref<32x128xf32, #tpu.memory_space<vmem>>) attributes {dimension_semantics = [#tpu.dimension_semantics<parallel>], iteration_bounds = array<i64: 2>, scalar_prefetch = 0 : i64, scratch_operands = 0 : i64, tpu.core_type = #tpu.core_type<tc>, window_params = [{transform_indices = @transform_0, window_bounds = array<i64: 8, 128>}, {transform_indices = @transform_1, window_bounds = array<i64: 1, 128, 128>}, {pipeline_mode = #tpu.pipeline_mode<synchronous>, transform_indices = @transform_2, window_bounds = array<i64: 32, 8>}, {pipeline_mode = #tpu.pipeline_mode<synchronous>, transform_indices = @transform_3, window_bounds = array<i64: 32, 128>}, {pipeline_mode = #tpu.pipeline_mode<synchronous>, transform_indices = @transform_4, window_bounds = array<i64: 32, 32>}, {pipeline_mode = #tpu.pipeline_mode<synchronous>, transform_indices = @transform_5, window_bounds = array<i64: 32, 128>}, {pipeline_mode = #tpu.pipeline_mode<synchronous>, transform_indices = @transform_6, window_bounds = array<i64: 32, 32>}, {pipeline_mode = #tpu.pipeline_mode<synchronous>, transform_indices = @transform_7, window_bounds = array<i64: 32, 128>}, {transform_indices = @transform_8, window_bounds = array<i64: 32, 128>}]} {
    %c0 = arith.constant 0 : index
    %c0_0 = arith.constant 0 : index
    %c0_1 = arith.constant 0 : index
    %0 = vector.load %arg2[%c0, %c0_0, %c0_1] : memref<1x128x128xbf16, #tpu.memory_space<vmem>>, vector<1x128x128xbf16>
    %1 = vector.shape_cast %0 : vector<1x128x128xbf16> to vector<128x128xbf16>
    %c0_2 = arith.constant 0 : index
    %c0_3 = arith.constant 0 : index
    %2 = vector.load %arg1[%c0_2, %c0_3] : memref<8x128xbf16, #tpu.memory_space<vmem>>, vector<8x128xbf16>
    %cst = arith.constant dense<0.000000e+00> : vector<8x128xf32>
    %3 = tpu.matmul %2, %1, %cst {dimension_numbers = #tpu.dot_dimension_numbers<[1], [0], [0], [1], [0, 0, 1, 1], [], []>} : vector<8x128xbf16>, vector<128x128xbf16>, vector<8x128xf32> -> vector<8x128xf32>
    %c0_4 = arith.constant 0 : index
    %c0_5 = arith.constant 0 : index
    %4 = vector.load %arg3[%c0_4, %c0_5] : memref<32x8xbf16, #tpu.memory_space<vmem>>, vector<32x8xbf16>
    %5 = arith.truncf %3 : vector<8x128xf32> to vector<8x128xbf16>
    %cst_6 = arith.constant dense<0.000000e+00> : vector<32x128xf32>
    %6 = tpu.matmul %4, %5, %cst_6 {dimension_numbers = #tpu.dot_dimension_numbers<[1], [0], [0], [1], [0, 0, 1, 1], [], []>} : vector<32x8xbf16>, vector<8x128xbf16>, vector<32x128xf32> -> vector<32x128xf32>
    %c0_7 = arith.constant 0 : index
    %c0_8 = arith.constant 0 : index
    %7 = vector.load %arg4[%c0_7, %c0_8] : memref<32x128xf32, #tpu.memory_space<vmem>>, vector<32x128xf32>
    %8 = arith.addf %6, %7 : vector<32x128xf32>
    %cst_9 = arith.constant 0.000000e+00 : f32
    %9 = vector.broadcast %cst_9 : f32 to vector<32x128xf32>
    %10 = arith.maximumf %8, %9 : vector<32x128xf32>
    %11 = arith.truncf %10 : vector<32x128xf32> to vector<32x128xbf16>
    %cst_10 = arith.constant dense<0.000000e+00> : vector<32x128xf32>
    %12 = tpu.matmul %11, %1, %cst_10 {dimension_numbers = #tpu.dot_dimension_numbers<[1], [0], [0], [1], [0, 0, 1, 1], [], []>} : vector<32x128xbf16>, vector<128x128xbf16>, vector<32x128xf32> -> vector<32x128xf32>
    %c0_11 = arith.constant 0 : index
    %c0_12 = arith.constant 0 : index
    %13 = vector.load %arg5[%c0_11, %c0_12] : memref<32x32xbf16, #tpu.memory_space<vmem>>, vector<32x32xbf16>
    %14 = arith.truncf %12 : vector<32x128xf32> to vector<32x128xbf16>
    %cst_13 = arith.constant dense<0.000000e+00> : vector<32x128xf32>
    %15 = tpu.matmul %13, %14, %cst_13 {dimension_numbers = #tpu.dot_dimension_numbers<[1], [0], [0], [1], [0, 0, 1, 1], [], []>} : vector<32x32xbf16>, vector<32x128xbf16>, vector<32x128xf32> -> vector<32x128xf32>
    %c0_14 = arith.constant 0 : index
    %c0_15 = arith.constant 0 : index
    %16 = vector.load %arg6[%c0_14, %c0_15] : memref<32x128xf32, #tpu.memory_space<vmem>>, vector<32x128xf32>
    %17 = arith.addf %15, %16 : vector<32x128xf32>
    %cst_16 = arith.constant 0.000000e+00 : f32
    %18 = vector.broadcast %cst_16 : f32 to vector<32x128xf32>
    %19 = arith.maximumf %17, %18 : vector<32x128xf32>
    %20 = arith.addf %19, %10 : vector<32x128xf32>
    %21 = arith.truncf %20 : vector<32x128xf32> to vector<32x128xbf16>
    %cst_17 = arith.constant dense<0.000000e+00> : vector<32x128xf32>
    %22 = tpu.matmul %21, %1, %cst_17 {dimension_numbers = #tpu.dot_dimension_numbers<[1], [0], [0], [1], [0, 0, 1, 1], [], []>} : vector<32x128xbf16>, vector<128x128xbf16>, vector<32x128xf32> -> vector<32x128xf32>
    %c0_18 = arith.constant 0 : index
    %c0_19 = arith.constant 0 : index
    %23 = vector.load %arg7[%c0_18, %c0_19] : memref<32x32xbf16, #tpu.memory_space<vmem>>, vector<32x32xbf16>
    %24 = arith.truncf %22 : vector<32x128xf32> to vector<32x128xbf16>
    %cst_20 = arith.constant dense<0.000000e+00> : vector<32x128xf32>
    %25 = tpu.matmul %23, %24, %cst_20 {dimension_numbers = #tpu.dot_dimension_numbers<[1], [0], [0], [1], [0, 0, 1, 1], [], []>} : vector<32x32xbf16>, vector<32x128xbf16>, vector<32x128xf32> -> vector<32x128xf32>
    %c0_21 = arith.constant 0 : index
    %c0_22 = arith.constant 0 : index
    %26 = vector.load %arg8[%c0_21, %c0_22] : memref<32x128xf32, #tpu.memory_space<vmem>>, vector<32x128xf32>
    %27 = arith.addf %25, %26 : vector<32x128xf32>
    %cst_23 = arith.constant 0.000000e+00 : f32
    %28 = vector.broadcast %cst_23 : f32 to vector<32x128xf32>
    %29 = arith.maximumf %27, %28 : vector<32x128xf32>
    %30 = arith.addf %29, %20 : vector<32x128xf32>
    %c0_24 = arith.constant 0 : index
    %c0_25 = arith.constant 0 : index
    %31 = vector.load %arg9[%c0_24, %c0_25] : memref<32x128xf32, #tpu.memory_space<vmem>>, vector<32x128xf32>
    tpu.vector_store %arg9[%c0_24, %c0_25], %30 {strides = array<i32>} : memref<32x128xf32, #tpu.memory_space<vmem>>, vector<32x128xf32>,
    return
  }
  func.func @transform_0(%arg0: i32) -> (i32, i32) {
    %c0_i32 = arith.constant 0 : i32
    %c0_i32_0 = arith.constant 0 : i32
    return %c0_i32, %arg0 : i32, i32
  }
  func.func @transform_1(%arg0: i32) -> (i32, i32, i32) {
    %c0_i32 = arith.constant 0 : i32
    %c0_i32_0 = arith.constant 0 : i32
    %c0_i32_1 = arith.constant 0 : i32
    return %arg0, %c0_i32, %c0_i32_0 : i32, i32, i32
  }
  func.func @transform_2(%arg0: i32) -> (i32, i32) {
    %c0_i32 = arith.constant 0 : i32
    %c0_i32_0 = arith.constant 0 : i32
    %c0_i32_1 = arith.constant 0 : i32
    return %c0_i32, %c0_i32_0 : i32, i32
  }
  func.func @transform_3(%arg0: i32) -> (i32, i32) {
    %c0_i32 = arith.constant 0 : i32
    %c0_i32_0 = arith.constant 0 : i32
    %c0_i32_1 = arith.constant 0 : i32
    return %c0_i32, %c0_i32_0 : i32, i32
  }
  func.func @transform_4(%arg0: i32) -> (i32, i32) {
    %c0_i32 = arith.constant 0 : i32
    %c0_i32_0 = arith.constant 0 : i32
    %c0_i32_1 = arith.constant 0 : i32
    return %c0_i32, %c0_i32_0 : i32, i32
  }
  func.func @transform_5(%arg0: i32) -> (i32, i32) {
    %c0_i32 = arith.constant 0 : i32
    %c0_i32_0 = arith.constant 0 : i32
    %c0_i32_1 = arith.constant 0 : i32
    return %c0_i32, %c0_i32_0 : i32, i32
  }
  func.func @transform_6(%arg0: i32) -> (i32, i32) {
    %c0_i32 = arith.constant 0 : i32
    %c0_i32_0 = arith.constant 0 : i32
    %c0_i32_1 = arith.constant 0 : i32
    return %c0_i32, %c0_i32_0 : i32, i32
  }
  func.func @transform_7(%arg0: i32) -> (i32, i32) {
    %c0_i32 = arith.constant 0 : i32
    %c0_i32_0 = arith.constant 0 : i32
    %c0_i32_1 = arith.constant 0 : i32
    return %c0_i32, %c0_i32_0 : i32, i32
  }
  func.func @transform_8(%arg0: i32) -> (i32, i32) {
    %c0_i32 = arith.constant 0 : i32
    %c0_i32_0 = arith.constant 0 : i32
    return %c0_i32, %arg0 : i32, i32
  }
}

</mosaic_0001>

<llo_original>
// kernel: encoder_forward.1
$region0: #{encoder_forward.1}
  #allocation0 [shape = 'u32[]', space=smem, size = 0x4, offset = 0x4, fixed_abs, tag = 'smem constant byte address 0x4 - core index']
  #allocation1 [shape = 'u32[72,128]{1,0:T(1,128)}', space=vmem, size = 0x9000, scoped, tag = 'internal scratch']
  %s0 = inlined_call_operand.vmem [shape: bf16[8,256], index: 0, kind: input, shape index: {}]
  %s1 = inlined_call_operand.vmem [shape: bf16[2,128,128], index: 1, kind: input, shape index: {}]
  %s2 = inlined_call_operand.vmem [shape: bf16[32,8], index: 2, kind: input, shape index: {}]
  %s3 = inlined_call_operand.vmem [shape: f32[32,128], index: 3, kind: input, shape index: {}]
  %s4 = inlined_call_operand.vmem [shape: bf16[32,32], index: 4, kind: input, shape index: {}]
  %s5 = inlined_call_operand.vmem [shape: f32[32,128], index: 5, kind: input, shape index: {}]
  %s6 = inlined_call_operand.vmem [shape: bf16[32,32], index: 6, kind: input, shape index: {}]
  %s7 = inlined_call_operand.vmem [shape: f32[32,128], index: 7, kind: input, shape index: {}]
  %s8 = inlined_call_operand.vmem [shape: f32[32,256], index: 8, kind: output, shape index: {}]
  %s9 = sld [smem:[#allocation0]]
  $region99: #{encoder_forward.1} parent=0
    _
  %s11 = ssub.s32 1, %s9
  %s12 = scalar_select 0, %s11, %s9
  $region1: #{encoder_forward.1} parent=0
    #allocation2 [shape = 'u8[32768]{0}', space=vmem, size = 0x8000, scoped, tag = 'output window, operand 0']
    loop: start=0, step=1, limit=4
    $region2: #{encoder_forward.1} parent=1 // loop_pre_header
      _
    $region3: #{encoder_forward.1} parent=1 // loop_header
      %s14 = sphi 0, %s18
      %p15 = scmp.ge.s32.totalorder %s14, 4
      %s24 = sphi 0, %s26
      %s27 = sphi 0, %s24
      %s28 = sphi 0, %s27
      %s44 = sphi 0, %s28
      %s50 = sphi 0, %s52
      %s53 = sphi 0, %s50
      %s54 = sphi 0, %s53
      %s70 = sphi 0, %s54
      %s74 = sphi 0, %s74
      %s76 = sphi 0, %s74
      %s77 = sphi 0, %s76
      %s91 = sphi 0, %s77
      %s95 = sphi 0, %s95
      %s97 = sphi 0, %s95
      %s98 = sphi 0, %s97
      %s112 = sphi 0, %s98
      %s116 = sphi 0, %s116
      %s118 = sphi 0, %s116
      %s119 = sphi 0, %s118
      %s133 = sphi 0, %s119
      %s137 = sphi 0, %s137
      %s139 = sphi 0, %s137
      %s140 = sphi 0, %s139
      %s154 = sphi 0, %s140
      %s158 = sphi 0, %s158
      %s160 = sphi 0, %s158
      %s161 = sphi 0, %s160
      %s175 = sphi 0, %s161
      %s179 = sphi 0, %s179
      %s181 = sphi 0, %s179
      %s182 = sphi 0, %s181
      %s196 = sphi 0, %s182
      %s202 = sphi 0, %s204
      %s205 = sphi 0, %s202
      %s206 = sphi 0, %s205
      %s222 = sphi 0, %s206
    $region4: #{encoder_forward.1} parent=1 // loop_header_branch
      %17 = sbr.rel (%p15) target = $region8
    $region5: #{encoder_forward.1} parent=1 // loop_body
      %s19 = ssub.s32 %s14, 1
      %s20 = ssub.s32 %s14, 2
      %s21 = sadd.s32 %s14, 1
      %s22 = ssub.s32 %s14, %s21
      %p23 = scmp.eq.s32.totalorder %s22, 0
      %s25 = sadd.s32 %s24, 1
      %s26 = scalar_select %p23, %s24, %s25
      %p29 = pneg %p23
      %p30 = scmp.eq.s32.totalorder %s14, 1
      %p31 = por %p29, %p30
      %p32 = scmp.ne.s32.totalorder %s24, %s27
      %p33 = scmp.eq.s32.totalorder %s14, 0
      %p34 = por %p32, %p33
      %p35 = scmp.ne.s32.totalorder %s24, %s27
      %p36 = scmp.eq.s32.totalorder %s19, 1
      %p37 = por %p35, %p36
      %p38 = scmp.ne.s32.totalorder %s27, %s28
      %p39 = scmp.eq.s32.totalorder %s19, 0
      %p40 = por %p38, %p39
      %p41 = scmp.ne.s32.totalorder %s27, %s28
      %p42 = scmp.eq.s32.totalorder %s20, 1
      %p43 = por %p41, %p42
      %p45 = scmp.ne.s32.totalorder %s28, %s44
      %p46 = scmp.eq.s32.totalorder %s20, 0
      %p47 = por %p45, %p46
      %s48 = ssub.s32 %s14, %s21
      %p49 = scmp.eq.s32.totalorder %s48, 0
      %s51 = sadd.s32 %s50, 1
      %s52 = scalar_select %p49, %s50, %s51
      %p55 = pneg %p49
      %p56 = scmp.eq.s32.totalorder %s14, 1
      %p57 = por %p55, %p56
      %p58 = scmp.ne.s32.totalorder %s50, %s53
      %p59 = scmp.eq.s32.totalorder %s14, 0
      %p60 = por %p58, %p59
      %p61 = scmp.ne.s32.totalorder %s50, %s53
      %p62 = scmp.eq.s32.totalorder %s19, 1
      %p63 = por %p61, %p62
      %p64 = scmp.ne.s32.totalorder %s53, %s54
      %p65 = scmp.eq.s32.totalorder %s19, 0
      %p66 = por %p64, %p65
      %p67 = scmp.ne.s32.totalorder %s53, %s54
      %p68 = scmp.eq.s32.totalorder %s20, 1
      %p69 = por %p67, %p68
      %p71 = scmp.ne.s32.totalorder %s54, %s70
      %p72 = scmp.eq.s32.totalorder %s20, 0
      %p73 = por %p71, %p72
      %s75 = sadd.s32 %s74, 1
      %p78 = scmp.eq.s32.totalorder %s14, 1
      %p79 = scmp.ne.s32.totalorder %s74, %s76
      %p80 = scmp.eq.s32.totalorder %s14, 0
      %p81 = por %p79, %p80
      %p82 = scmp.ne.s32.totalorder %s74, %s76
      %p83 = scmp.eq.s32.totalorder %s19, 1
      %p84 = por %p82, %p83
      %p85 = scmp.ne.s32.totalorder %s76, %s77
      %p86 = scmp.eq.s32.totalorder %s19, 0
      %p87 = por %p85, %p86
      %p88 = scmp.ne.s32.totalorder %s76, %s77
      %p89 = scmp.eq.s32.totalorder %s20, 1
      %p90 = por %p88, %p89
      %p92 = scmp.ne.s32.totalorder %s77, %s91
      %p93 = scmp.eq.s32.totalorder %s20, 0
      %p94 = por %p92, %p93
      %s96 = sadd.s32 %s95, 1
      %p99 = scmp.eq.s32.totalorder %s14, 1
      %p100 = scmp.ne.s32.totalorder %s95, %s97
      %p101 = scmp.eq.s32.totalorder %s14, 0
      %p102 = por %p100, %p101
      %p103 = scmp.ne.s32.totalorder %s95, %s97
      %p104 = scmp.eq.s32.totalorder %s19, 1
      %p105 = por %p103, %p104
      %p106 = scmp.ne.s32.totalorder %s97, %s98
      %p107 = scmp.eq.s32.totalorder %s19, 0
      %p108 = por %p106, %p107
      %p109 = scmp.ne.s32.totalorder %s97, %s98
      %p110 = scmp.eq.s32.totalorder %s20, 1
      %p111 = por %p109, %p110
      %p113 = scmp.ne.s32.totalorder %s98, %s112
      %p114 = scmp.eq.s32.totalorder %s20, 0
      %p115 = por %p113, %p114
      %s117 = sadd.s32 %s116, 1
      %p120 = scmp.eq.s32.totalorder %s14, 1
      %p121 = scmp.ne.s32.totalorder %s116, %s118
      %p122 = scmp.eq.s32.totalorder %s14, 0
      %p123 = por %p121, %p122
      %p124 = scmp.ne.s32.totalorder %s116, %s118
      %p125 = scmp.eq.s32.totalorder %s19, 1
      %p126 = por %p124, %p125
      %p127 = scmp.ne.s32.totalorder %s118, %s119
      %p128 = scmp.eq.s32.totalorder %s19, 0
      %p129 = por %p127, %p128
      %p130 = scmp.ne.s32.totalorder %s118, %s119
      %p131 = scmp.eq.s32.totalorder %s20, 1
      %p132 = por %p130, %p131
      %p134 = scmp.ne.s32.totalorder %s119, %s133
      %p135 = scmp.eq.s32.totalorder %s20, 0
      %p136 = por %p134, %p135
      %s138 = sadd.s32 %s137, 1
      %p141 = scmp.eq.s32.totalorder %s14, 1
      %p142 = scmp.ne.s32.totalorder %s137, %s139
      %p143 = scmp.eq.s32.totalorder %s14, 0
      %p144 = por %p142, %p143
      %p145 = scmp.ne.s32.totalorder %s137, %s139
      %p146 = scmp.eq.s32.totalorder %s19, 1
      %p147 = por %p145, %p146
      %p148 = scmp.ne.s32.totalorder %s139, %s140
      %p149 = scmp.eq.s32.totalorder %s19, 0
      %p150 = por %p148, %p149
      %p151 = scmp.ne.s32.totalorder %s139, %s140
      %p152 = scmp.eq.s32.totalorder %s20, 1
      %p153 = por %p151, %p152
      %p155 = scmp.ne.s32.totalorder %s140, %s154
      %p156 = scmp.eq.s32.totalorder %s20, 0
      %p157 = por %p155, %p156
      %s159 = sadd.s32 %s158, 1
      %p162 = scmp.eq.s32.totalorder %s14, 1
      %p163 = scmp.ne.s32.totalorder %s158, %s160
      %p164 = scmp.eq.s32.totalorder %s14, 0
      %p165 = por %p163, %p164
      %p166 = scmp.ne.s32.totalorder %s158, %s160
      %p167 = scmp.eq.s32.totalorder %s19, 1
      %p168 = por %p166, %p167
      %p169 = scmp.ne.s32.totalorder %s160, %s161
      %p170 = scmp.eq.s32.totalorder %s19, 0
      %p171 = por %p169, %p170
      %p172 = scmp.ne.s32.totalorder %s160, %s161
      %p173 = scmp.eq.s32.totalorder %s20, 1
      %p174 = por %p172, %p173
      %p176 = scmp.ne.s32.totalorder %s161, %s175
      %p177 = scmp.eq.s32.totalorder %s20, 0
      %p178 = por %p176, %p177
      %s180 = sadd.s32 %s179, 1
      %p183 = scmp.eq.s32.totalorder %s14, 1
      %p184 = scmp.ne.s32.totalorder %s179, %s181
      %p185 = scmp.eq.s32.totalorder %s14, 0
      %p186 = por %p184, %p185
      %p187 = scmp.ne.s32.totalorder %s179, %s181
      %p188 = scmp.eq.s32.totalorder %s19, 1
      %p189 = por %p187, %p188
      %p190 = scmp.ne.s32.totalorder %s181, %s182
      %p191 = scmp.eq.s32.totalorder %s19, 0
      %p192 = por %p190, %p191
      %p193 = scmp.ne.s32.totalorder %s181, %s182
      %p194 = scmp.eq.s32.totalorder %s20, 1
      %p195 = por %p193, %p194
      %p197 = scmp.ne.s32.totalorder %s182, %s196
      %p198 = scmp.eq.s32.totalorder %s20, 0
      %p199 = por %p197, %p198
      %s200 = ssub.s32 %s14, %s21
      %p201 = scmp.eq.s32.totalorder %s200, 0
      %s203 = sadd.s32 %s202, 1
      %s204 = scalar_select %p201, %s202, %s203
      %p207 = pneg %p201
      %p208 = scmp.eq.s32.totalorder %s14, 1
      %p209 = por %p207, %p208
      %p210 = scmp.ne.s32.totalorder %s202, %s205
      %p211 = scmp.eq.s32.totalorder %s14, 0
      %p212 = por %p210, %p211
      %p213 = scmp.ne.s32.totalorder %s202, %s205
      %p214 = scmp.eq.s32.totalorder %s19, 1
      %p215 = por %p213, %p214
      %p216 = scmp.ne.s32.totalorder %s205, %s206
      %p217 = scmp.eq.s32.totalorder %s19, 0
      %p218 = por %p216, %p217
      %p219 = scmp.ne.s32.totalorder %s205, %s206
      %p220 = scmp.eq.s32.totalorder %s20, 1
      %p221 = por %p219, %p220
      %p223 = scmp.ne.s32.totalorder %s206, %s222
      %p224 = scmp.eq.s32.totalorder %s20, 0
      %p225 = por %p223, %p224
      %p226 = scmp.le.s32.totalorder 1, %s14
      %p227 = scmp.lt.s32.totalorder %s14, 3
      %p228 = pnand %p226, %p227
      %p229 = pneg %p228
      // Predicated region
      $region9: #{encoder_forward.1} parent=5 // pred_check
        _
      $region10: #{encoder_forward.1} parent=5 // pred_check_branch
        %231 = sbr.rel (%p228) target = $region12
      $region11: #{encoder_forward.1} parent=5 // pred_region
        %s232 = ssub.s32 %s14, 1
        // Predicated region
        $region13: #{encoder_forward.1} parent=11 // pred_check
          %p233 = pneg %p87
        $region14: #{encoder_forward.1} parent=11 // pred_check_branch
          %235 = sbr.rel (%p233) target = $region16
        $region15: #{encoder_forward.1} parent=11 // pred_region
          _
        $region16: #{encoder_forward.1} parent=11 // pred_fallthru
          _
        // Predicated region
        $region17: #{encoder_forward.1} parent=11 // pred_check
          %p236 = pneg %p108
        $region18: #{encoder_forward.1} parent=11 // pred_check_branch
          %238 = sbr.rel (%p236) target = $region20
        $region19: #{encoder_forward.1} parent=11 // pred_region
          _
        $region20: #{encoder_forward.1} parent=11 // pred_fallthru
          _
        // Predicated region
        $region21: #{encoder_forward.1} parent=11 // pred_check
          %p239 = pneg %p129
        $region22: #{encoder_forward.1} parent=11 // pred_check_branch
          %241 = sbr.rel (%p239) target = $region24
        $region23: #{encoder_forward.1} parent=11 // pred_region
          _
        $region24: #{encoder_forward.1} parent=11 // pred_fallthru
          _
        // Predicated region
        $region25: #{encoder_forward.1} parent=11 // pred_check
          %p242 = pneg %p150
        $region26: #{encoder_forward.1} parent=11 // pred_check_branch
          %244 = sbr.rel (%p242) target = $region28
        $region27: #{encoder_forward.1} parent=11 // pred_region
          _
        $region28: #{encoder_forward.1} parent=11 // pred_fallthru
          _
        // Predicated region
        $region29: #{encoder_forward.1} parent=11 // pred_check
          %p245 = pneg %p171
        $region30: #{encoder_forward.1} parent=11 // pred_check_branch
          %247 = sbr.rel (%p245) target = $region32
        $region31: #{encoder_forward.1} parent=11 // pred_region
          _
        $region32: #{encoder_forward.1} parent=11 // pred_fallthru
          _
        // Predicated region
        $region33: #{encoder_forward.1} parent=11 // pred_check
          %p248 = pneg %p192
        $region34: #{encoder_forward.1} parent=11 // pred_check_branch
          %250 = sbr.rel (%p248) target = $region36
        $region35: #{encoder_forward.1} parent=11 // pred_region
          _
        $region36: #{encoder_forward.1} parent=11 // pred_fallthru
          _
      $region12: #{encoder_forward.1} parent=5 // pred_fallthru
        _
      %p251 = scmp.lt.s32.totalorder %s14, 2
      // Predicated region
      $region37: #{encoder_forward.1} parent=5 // pred_check
        %p252 = pneg %p251
      $region38: #{encoder_forward.1} parent=5 // pred_check_branch
        %254 = sbr.rel (%p252) target = $region40
      $region39: #{encoder_forward.1} parent=5 // pred_region
        // Predicated region
        $region41: #{encoder_forward.1} parent=39 // pred_check
          %p255 = pneg %p34
        $region42: #{encoder_forward.1} parent=39 // pred_check_branch
          %257 = sbr.rel (%p255) target = $region44
        $region43: #{encoder_forward.1} parent=39 // pred_region
          %p258 = scmp.lt.s32.totalorder %s14, 1
          %s259 = scalar_select %p258, %s14, 1
          %s260 = smul.addr %s259, 4
          %s261 = scalar_lea.vmem %s0, %s260
        $region44: #{encoder_forward.1} parent=39 // pred_fallthru
          _
        // Predicated region
        $region45: #{encoder_forward.1} parent=39 // pred_check
          %p262 = pneg %p60
        $region46: #{encoder_forward.1} parent=39 // pred_check_branch
          %264 = sbr.rel (%p262) target = $region48
        $region47: #{encoder_forward.1} parent=39 // pred_region
          %p265 = scmp.lt.s32.totalorder %s14, 1
          %s266 = scalar_select %p265, %s14, 1
          %s267 = smul.addr %s266, 16
          %s268 = smul.addr %s267, 4
          %s269 = scalar_lea.vmem %s1, %s268
        $region48: #{encoder_forward.1} parent=39 // pred_fallthru
          _
      $region40: #{encoder_forward.1} parent=5 // pred_fallthru
        _
      %p270 = scmp.le.s32.totalorder 1, %s14
      %p271 = scmp.lt.s32.totalorder %s14, 3
      %p272 = pnand %p270, %p271
      %p273 = pneg %p272
      // Predicated region
      $region49: #{encoder_forward.1} parent=5 // pred_check
        _
      $region50: #{encoder_forward.1} parent=5 // pred_check_branch
        %275 = sbr.rel (%p272) target = $region52
      $region51: #{encoder_forward.1} parent=5 // pred_region
        %s276 = ssub.s32 %s14, 1
        %p277 = scmp.lt.s32.totalorder %s19, 1
        %s278 = scalar_select %p277, %s19, 1
        %s279 = smul.addr %s278, 4
        %s280 = scalar_lea.vmem %s0, %s279
        %p281 = pneg %p40
        %p282 = pneg %p37
        %p283 = scmp.lt.s32.totalorder %s19, 1
        %s284 = scalar_select %p283, %s19, 1
        %s285 = smul.addr %s284, 16
        %s286 = smul.addr %s285, 4
        %s287 = scalar_lea.vmem %s1, %s286
        %p288 = pneg %p66
        %p289 = pneg %p63
        %p290 = pneg %p87
        %p291 = pneg %p84
        %p292 = pneg %p108
        %p293 = pneg %p105
        %p294 = pneg %p129
        %p295 = pneg %p126
        %p296 = pneg %p150
        %p297 = pneg %p147
        %p298 = pneg %p171
        %p299 = pneg %p168
        %p300 = pneg %p192
        %p301 = pneg %p189
        %p302 = pneg %p218
        %p303 = pneg %p215
        %s304 = sand.u32 %s205, 1
        %s305 = sand.u32 %s205, 1
        %s306 = smul.addr %s305, 32
        %s307 = scalar_lea.vmem [#allocation2], %s306
        %p308 = scmp.lt.s32.totalorder %s19, 1
        %s309 = scalar_select %p308, %s19, 1
        %s310 = smul.addr %s309, 4
        %s311 = scalar_lea.vmem %s0, %s310
        %p312 = scmp.lt.s32.totalorder %s19, 1
        %s313 = scalar_select %p312, %s19, 1
        %s314 = smul.addr %s313, 16
        %s315 = smul.addr %s314, 4
        %s316 = scalar_lea.vmem %s1, %s315
        %v318 = vld [vmem:[%s316] sm:$0xf]
        %v319 = vld [vmem:[%s316 + $0x4] sm:$0xf]
        %v320 = vld [vmem:[%s316 + $0x8] sm:$0xf]
        %v321 = vld [vmem:[%s316 + $0xc] sm:$0xf]
        %v322 = vld [vmem:[%s316 + $0x10] sm:$0xf]
        %v323 = vld [vmem:[%s316 + $0x14] sm:$0xf]
        %v324 = vld [vmem:[%s316 + $0x18] sm:$0xf]
        %v325 = vld [vmem:[%s316 + $0x1c] sm:$0xf]
        %v326 = vld [vmem:[%s316 + $0x20] sm:$0xf]
        %v327 = vld [vmem:[%s316 + $0x24] sm:$0xf]
        %v328 = vld [vmem:[%s316 + $0x28] sm:$0xf]
        %v329 = vld [vmem:[%s316 + $0x2c] sm:$0xf]
        %v330 = vld [vmem:[%s316 + $0x30] sm:$0xf]
        %v331 = vld [vmem:[%s316 + $0x34] sm:$0xf]
        %v332 = vld [vmem:[%s316 + $0x38] sm:$0xf]
        %v333 = vld [vmem:[%s316 + $0x3c] sm:$0xf]
        %v334 = vld [vmem:[%s311] sm:$0xf]
        %v351 = vunpack.c.l.b16 %v318
        %v352 = vunpack.c.l.b16 %v319
        %v353 = vunpack.c.l.b16 %v320
        %v354 = vunpack.c.l.b16 %v321
        %v355 = vunpack.c.l.b16 %v322
        %v356 = vunpack.c.l.b16 %v323
        %v357 = vunpack.c.l.b16 %v324
        %v358 = vunpack.c.l.b16 %v325
        %v359 = vunpack.c.l.b16 %v326
        %v360 = vunpack.c.l.b16 %v327
        %v361 = vunpack.c.l.b16 %v328
        %v362 = vunpack.c.l.b16 %v329
        %v363 = vunpack.c.l.b16 %v330
        %v364 = vunpack.c.l.b16 %v331
        %v365 = vunpack.c.l.b16 %v332
        %v366 = vunpack.c.l.b16 %v333
        %v367 = vpack.c.b16 %v352, %v351
        %v368 = vpack.c.b16 %v354, %v353
        %v369 = vpack.c.b16 %v356, %v355
        %v370 = vpack.c.b16 %v358, %v357
        %v371 = vpack.c.b16 %v360, %v359
        %v372 = vpack.c.b16 %v362, %v361
        %v373 = vpack.c.b16 %v364, %v363
        %v374 = vpack.c.b16 %v366, %v365
        %383 = vmatpush.bf16.msra.mxu0 %v374
        %384 = vmatpush.bf16.msra.mxu0 %v373
        %385 = vmatpush.bf16.msra.mxu0 %v372
        %386 = vmatpush.bf16.msra.mxu0 %v371
        %387 = vmatpush.bf16.msra.mxu0 %v370
        %388 = vmatpush.bf16.msra.mxu0 %v369
        %389 = vmatpush.bf16.msra.mxu0 %v368
        %390 = vmatpush.bf16.msra.mxu0 %v367
        %391 = vmatmul.bf16.gmra.mxu0 %v334
        %v392 = vpop.f32.mrf.mxu0
        %v393 = vadd.f32 0.0, %v392
        %v394 = vpop.f32.mrf.mxu0
        %395 = vdwg.mxu0
        %v396 = vld [vmem:[%s2] sm:$0xf]
        %v397 = vld [vmem:[%s2 + $0x4] sm:$0xf]
        %v398 = vld [vmem:[%s2 + $0x8] sm:$0xf]
        %v399 = vld [vmem:[%s2 + $0xc] sm:$0xf]
        %v400 = vpack.c.bf16 %v393, %v393
        %v401 = vld [vmem:[%s3] sm:$0xff]
        %v402 = vld [vmem:[%s3 + $0x8] sm:$0xff]
        %v403 = vld [vmem:[%s3 + $0x10] sm:$0xff]
        %v404 = vld [vmem:[%s3 + $0x18] sm:$0xff]
        %v409 = vunpack.c.l.b16 %v396
        %v410 = vunpack.c.l.b16 %v397
        %v411 = vunpack.c.l.b16 %v398
        %v412 = vunpack.c.l.b16 %v399
        %v413 = vpack.c.b16 %v410, %v409
        %v414 = vpack.c.b16 %v412, %v411
        %vm415 = vcmask 64512
        %v417 = vsel %vm415, %v413, 0
        %v420 = vsel %vm415, %v414, 0
        %vm422 = vcmask 1043456
        %v424 = vsel %vm422, %v400, 0
        %426 = vmatpush.bf16.msra.mxu0 0
        %427 = vmatpush.bf16.msra.mxu0 0
        %428 = vmatpush.bf16.msra.mxu0 0
        %429 = vmatpush.bf16.msra.mxu0 0
        %430 = vmatpush.bf16.msra.mxu0 0
        %431 = vmatpush.bf16.msra.mxu0 0
        %432 = vmatpush.bf16.msra.mxu0 0
        %433 = vmatpush.bf16.msra.mxu0 %v424
        %434 = vmatmul.bf16.gmra.mxu0 %v417
        %v435 = vpop.f32.mrf.mxu0
        %v436 = vadd.f32 %v401, %v435
        %v437 = vpop.f32.mrf.mxu0
        %v438 = vadd.f32 %v402, %v437
        %439 = vmatmul.bf16.gmra.mxu0 %v420
        %v440 = vpop.f32.mrf.mxu0
        %v441 = vadd.f32 %v403, %v440
        %v442 = vpop.f32.mrf.mxu0
        %v443 = vadd.f32 %v404, %v442
        %444 = vdwg.mxu0
        %v445 = vmax.f32 %v436, 0.0
        %v446 = vmax.f32 %v438, 0.0
        %v447 = vmax.f32 %v441, 0.0
        %v448 = vmax.f32 %v443, 0.0
        %v449 = vpack.c.bf16 %v446, %v445
        %v450 = vpack.c.bf16 %v448, %v447
        %451 = vmatpush.bf16.msra.mxu0 %v374
        %452 = vmatpush.bf16.msra.mxu0 %v373
        %453 = vmatpush.bf16.msra.mxu0 %v372
        %454 = vmatpush.bf16.msra.mxu0 %v371
        %455 = vmatpush.bf16.msra.mxu0 %v370
        %456 = vmatpush.bf16.msra.mxu0 %v369
        %457 = vmatpush.bf16.msra.mxu0 %v368
        %458 = vmatpush.bf16.msra.mxu0 %v367
        %459 = vmatmul.bf16.gmra.mxu0 %v449
        %v460 = vpop.f32.mrf.mxu0
        %v461 = vadd.f32 0.0, %v460
        %v462 = vpop.f32.mrf.mxu0
        %v463 = vadd.f32 0.0, %v462
        %464 = vmatmul.bf16.gmra.mxu0 %v450
        %v465 = vpop.f32.mrf.mxu0
        %v466 = vadd.f32 0.0, %v465
        %v467 = vpop.f32.mrf.mxu0
        %v468 = vadd.f32 0.0, %v467
        %469 = vdwg.mxu0
        %v470 = vld [vmem:[%s4] sm:$0xf]
        %v471 = vld [vmem:[%s4 + $0x4] sm:$0xf]
        %v472 = vld [vmem:[%s4 + $0x8] sm:$0xf]
        %v473 = vld [vmem:[%s4 + $0xc] sm:$0xf]
        %v474 = vpack.c.bf16 %v463, %v461
        %v475 = vpack.c.bf16 %v468, %v466
        %v476 = vld [vmem:[%s5] sm:$0xff]
        %v477 = vld [vmem:[%s5 + $0x8] sm:$0xff]
        %v478 = vld [vmem:[%s5 + $0x10] sm:$0xff]
        %v479 = vld [vmem:[%s5 + $0x18] sm:$0xff]
        %v484 = vunpack.c.l.b16 %v470
        %v485 = vunpack.c.l.b16 %v471
        %v486 = vunpack.c.l.b16 %v472
        %v487 = vunpack.c.l.b16 %v473
        %v488 = vpack.c.b16 %v485, %v484
        %v489 = vpack.c.b16 %v487, %v486
        %vm490 = vcmask 261120
        %v492 = vsel %vm490, %v488, 0
        %v495 = vsel %vm490, %v489, 0
        %497 = vmatpush.bf16.msra.mxu0 0
        %498 = vmatpush.bf16.msra.mxu0 0
        %499 = vmatpush.bf16.msra.mxu0 0
        %500 = vmatpush.bf16.msra.mxu0 0
        %501 = vmatpush.bf16.msra.mxu0 0
        %502 = vmatpush.bf16.msra.mxu0 0
        %503 = vmatpush.bf16.msra.mxu0 %v475
        %504 = vmatpush.bf16.msra.mxu0 %v474
        %505 = vmatmul.bf16.gmra.mxu0 %v492
        %v506 = vpop.f32.mrf.mxu0
        %v507 = vadd.f32 %v476, %v506
        %v508 = vpop.f32.mrf.mxu0
        %v509 = vadd.f32 %v477, %v508
        %510 = vmatmul.bf16.gmra.mxu0 %v495
        %v511 = vpop.f32.mrf.mxu0
        %v512 = vadd.f32 %v478, %v511
        %v513 = vpop.f32.mrf.mxu0
        %v514 = vadd.f32 %v479, %v513
        %515 = vdwg.mxu0
        %v516 = vmax.f32 %v507, 0.0
        %v517 = vmax.f32 %v509, 0.0
        %v518 = vmax.f32 %v512, 0.0
        %v519 = vmax.f32 %v514, 0.0
        %v520 = vadd.f32 %v516, %v445
        %v521 = vadd.f32 %v517, %v446
        %v522 = vadd.f32 %v518, %v447
        %v523 = vadd.f32 %v519, %v448
        %v524 = vpack.c.bf16 %v521, %v520
        %v525 = vpack.c.bf16 %v523, %v522
        %526 = vmatpush.bf16.msra.mxu0 %v374
        %527 = vmatpush.bf16.msra.mxu0 %v373
        %528 = vmatpush.bf16.msra.mxu0 %v372
        %529 = vmatpush.bf16.msra.mxu0 %v371
        %530 = vmatpush.bf16.msra.mxu0 %v370
        %531 = vmatpush.bf16.msra.mxu0 %v369
        %532 = vmatpush.bf16.msra.mxu0 %v368
        %533 = vmatpush.bf16.msra.mxu0 %v367
        %534 = vmatmul.bf16.gmra.mxu0 %v524
        %v535 = vpop.f32.mrf.mxu0
        %v536 = vadd.f32 0.0, %v535
        %v537 = vpop.f32.mrf.mxu0
        %v538 = vadd.f32 0.0, %v537
        %539 = vmatmul.bf16.gmra.mxu0 %v525
        %v540 = vpop.f32.mrf.mxu0
        %v541 = vadd.f32 0.0, %v540
        %v542 = vpop.f32.mrf.mxu0
        %v543 = vadd.f32 0.0, %v542
        %544 = vdwg.mxu0
        %v545 = vld [vmem:[%s6] sm:$0xf]
        %v546 = vld [vmem:[%s6 + $0x4] sm:$0xf]
        %v547 = vld [vmem:[%s6 + $0x8] sm:$0xf]
        %v548 = vld [vmem:[%s6 + $0xc] sm:$0xf]
        %v549 = vpack.c.bf16 %v538, %v536
        %v550 = vpack.c.bf16 %v543, %v541
        %v551 = vld [vmem:[%s7] sm:$0xff]
        %v552 = vld [vmem:[%s7 + $0x8] sm:$0xff]
        %v553 = vld [vmem:[%s7 + $0x10] sm:$0xff]
        %v554 = vld [vmem:[%s7 + $0x18] sm:$0xff]
        %v559 = vunpack.c.l.b16 %v545
        %v560 = vunpack.c.l.b16 %v546
        %v561 = vunpack.c.l.b16 %v547
        %v562 = vunpack.c.l.b16 %v548
        %v563 = vpack.c.b16 %v560, %v559
        %v564 = vpack.c.b16 %v562, %v561
        %v566 = vsel %vm490, %v563, 0
        %v569 = vsel %vm490, %v564, 0
        %571 = vmatpush.bf16.msra.mxu0 0
        %572 = vmatpush.bf16.msra.mxu0 0
        %573 = vmatpush.bf16.msra.mxu0 0
        %574 = vmatpush.bf16.msra.mxu0 0
        %575 = vmatpush.bf16.msra.mxu0 0
        %576 = vmatpush.bf16.msra.mxu0 0
        %577 = vmatpush.bf16.msra.mxu0 %v550
        %578 = vmatpush.bf16.msra.mxu0 %v549
        %579 = vmatmul.bf16.gmra.mxu0 %v566
        %v580 = vpop.f32.mrf.mxu0
        %v581 = vadd.f32 %v551, %v580
        %v582 = vpop.f32.mrf.mxu0
        %v583 = vadd.f32 %v552, %v582
        %584 = vmatmul.bf16.gmra.mxu0 %v569
        %v585 = vpop.f32.mrf.mxu0
        %v586 = vadd.f32 %v553, %v585
        %v587 = vpop.f32.mrf.mxu0
        %v588 = vadd.f32 %v554, %v587
        %589 = vdwg.mxu0
        %v590 = vmax.f32 %v581, 0.0
        %v591 = vmax.f32 %v583, 0.0
        %v592 = vmax.f32 %v586, 0.0
        %v593 = vmax.f32 %v588, 0.0
        %v594 = vadd.f32 %v590, %v520
        %v595 = vadd.f32 %v591, %v521
        %v596 = vadd.f32 %v592, %v522
        %v597 = vadd.f32 %v593, %v523
        %598 = vst [vmem:[%s307] sm:$0xff] %v594
        %599 = vst [vmem:[%s307 + $0x8] sm:$0xff] %v595
        %600 = vst [vmem:[%s307 + $0x10] sm:$0xff] %v596
        %601 = vst [vmem:[%s307 + $0x18] sm:$0xff] %v597
        %s602 = sand.u32 %s205, 1
        %s603 = sand.u32 %s205, 1
        %s604 = smul.addr %s603, 32
        %s605 = scalar_lea.vmem [#allocation2], %s604
        // Predicated region
        $region53: #{encoder_forward.1} parent=51 // pred_check
          %p606 = pneg %p215
        $region54: #{encoder_forward.1} parent=51 // pred_check_branch
          %608 = sbr.rel (%p606) target = $region56
        $region55: #{encoder_forward.1} parent=51 // pred_region
          %s609 = smul.addr %s19, 8
          %s610 = scalar_lea.vmem %s8, %s609
          // Predicated region
          $region57: #{encoder_forward.1} parent=55 // pred_check
            _
          $region58: #{encoder_forward.1} parent=55 // pred_check_branch
            %612 = sbr.rel (0) target = $region60
          $region59: #{encoder_forward.1} parent=55 // pred_region
            // Predicated region
            $region61: #{encoder_forward.1} parent=59 // pred_check
              _
            $region62: #{encoder_forward.1} parent=59 // pred_check_branch
              %614 = sbr.rel (0) target = $region64
            $region63: #{encoder_forward.1} parent=59 // pred_region
              // Predicated region
              $region76: #{encoder_forward.1} parent=63 // pred_check
                _
              $region77: #{encoder_forward.1} parent=63 // pred_check_branch
                %636 = sbr.rel (0) target = $region79
              $region78: #{encoder_forward.1} parent=63 // pred_region
                loop: start=0, step=1, limit=1
                $region80: #{encoder_forward.1} parent=78 // loop_pre_header
                  _
                $region81: #{encoder_forward.1} parent=78 // loop_header
                  %s638 = sphi 0, %s642
                  %p639 = scmp.ge.s32.totalorder %s638, 1
                  %s643 = sphi %s605, %s605
                  %s644 = sphi %s610, %s610
                $region82: #{encoder_forward.1} parent=78 // loop_header_branch
                  %641 = sbr.rel (%p639) target = $region86
                $region83: #{encoder_forward.1} parent=78 // loop_body
                  %v645 = vld [vmem:[%s643] sm:$0xff]
                  %646 = vst [vmem:[%s644] sm:$0xff] %v645
                  %v647 = vld [vmem:[%s643 + $0x8] sm:$0xff]
                  %648 = vst [vmem:[%s644 + $0x10] sm:$0xff] %v647
                  %v649 = vld [vmem:[%s643 + $0x10] sm:$0xff]
                  %650 = vst [vmem:[%s644 + $0x20] sm:$0xff] %v649
                  %v651 = vld [vmem:[%s643 + $0x18] sm:$0xff]
                  %652 = vst [vmem:[%s644 + $0x30] sm:$0xff] %v651
                $region84: #{encoder_forward.1} parent=78 // loop_footer
                  %s642 = sadd.s32 1, %s638
                $region85: #{encoder_forward.1} parent=78 // loop_footer_branch
                  %637 = sbr.rel target = $region81
                $region86: #{encoder_forward.1} parent=78 // loop_exit
                  _
              $region79: #{encoder_forward.1} parent=63 // pred_fallthru
                _
              // Predicated region
              $region87: #{encoder_forward.1} parent=63 // pred_check
                _
              $region88: #{encoder_forward.1} parent=63 // pred_check_branch
                %654 = sbr.rel target = $region90
              $region89: #{encoder_forward.1} parent=63 // pred_region
                _
              $region90: #{encoder_forward.1} parent=63 // pred_fallthru
                _
            $region64: #{encoder_forward.1} parent=59 // pred_fallthru
              _
            // Predicated region
            $region65: #{encoder_forward.1} parent=59 // pred_check
              _
            $region66: #{encoder_forward.1} parent=59 // pred_check_branch
              %616 = sbr.rel target = $region68
            $region67: #{encoder_forward.1} parent=59 // pred_region
              %s618 = ssub.s32 256, 1
              loop: start=0, step=1, limit=1
              $region69: #{encoder_forward.1} parent=67 // loop_pre_header
                _
              $region70: #{encoder_forward.1} parent=67 // loop_header
                %s620 = sphi 0, %s624
                %p621 = scmp.ge.s32.totalorder %s620, 1
                %s625 = sphi %s605, %s605
                %s626 = sphi %s610, %s610
              $region71: #{encoder_forward.1} parent=67 // loop_header_branch
                %623 = sbr.rel (%p621) target = $region75
              $region72: #{encoder_forward.1} parent=67 // loop_body
                %v627 = vld [vmem:[%s625] sm:%s618]
                %628 = vst [vmem:[%s626] sm:%s618] %v627
                %v629 = vld [vmem:[%s625 + $0x8] sm:%s618]
                %630 = vst [vmem:[%s626 + $0x10] sm:%s618] %v629
                %v631 = vld [vmem:[%s625 + $0x10] sm:%s618]
                %632 = vst [vmem:[%s626 + $0x20] sm:%s618] %v631
                %v633 = vld [vmem:[%s625 + $0x18] sm:%s618]
                %634 = vst [vmem:[%s626 + $0x30] sm:%s618] %v633
              $region73: #{encoder_forward.1} parent=67 // loop_footer
                %s624 = sadd.s32 1, %s620
              $region74: #{encoder_forward.1} parent=67 // loop_footer_branch
                %619 = sbr.rel target = $region70
              $region75: #{encoder_forward.1} parent=67 // loop_exit
                _
            $region68: #{encoder_forward.1} parent=59 // pred_fallthru
              _
          $region60: #{encoder_forward.1} parent=55 // pred_fallthru
            _
          %655 = vnop
        $region56: #{encoder_forward.1} parent=51 // pred_fallthru
          _
      $region52: #{encoder_forward.1} parent=5 // pred_fallthru
        _
      %p656 = scmp.le.s32.totalorder 2, %s14
      // Predicated region
      $region91: #{encoder_forward.1} parent=5 // pred_check
        %p657 = pneg %p656
      $region92: #{encoder_forward.1} parent=5 // pred_check_branch
        %659 = sbr.rel (%p657) target = $region94
      $region93: #{encoder_forward.1} parent=5 // pred_region
        %s660 = ssub.s32 %s14, 2
        // Predicated region
        $region95: #{encoder_forward.1} parent=93 // pred_check
          %p661 = pneg %p221
        $region96: #{encoder_forward.1} parent=93 // pred_check_branch
          %663 = sbr.rel (%p661) target = $region98
        $region97: #{encoder_forward.1} parent=93 // pred_region
          %s664 = sand.u32 %s206, 1
          %s665 = sand.u32 %s206, 1
          %s666 = smul.addr %s665, 32
          %s667 = scalar_lea.vmem [#allocation2], %s666
        $region98: #{encoder_forward.1} parent=93 // pred_fallthru
          _
      $region94: #{encoder_forward.1} parent=5 // pred_fallthru
        _
    $region6: #{encoder_forward.1} parent=1 // loop_footer
      %s18 = sadd.s32 1, %s14
    $region7: #{encoder_forward.1} parent=1 // loop_footer_branch
      %13 = sbr.rel target = $region3
    $region8: #{encoder_forward.1} parent=1 // loop_exit
      _

</llo_original>
